<compile_context>
chip_gen: v6e
topology: v6e:2x2x1
jax: 0.10.0
libtpu: 0.0.40
codegen_flags: <defaults>
</compile_context>

<pallas_src>
import functools

import jax
import jax.numpy as jnp
from jax.experimental import pallas as pl
from jax.experimental.pallas import tpu as pltpu


_TARGET_BLOCK_BYTES = 2 << 20  # ~2 MiB seq block; x2 buffers x (in+out) ~= 8 MiB VMEM


# ----------------------------- kernels ------------------------------------ #
def _pos_embed_eval_kernel(seq_ref, pos_ref, out_ref):
    # Accumulate in f32 (matches PyTorch type promotion when seq is low
    # precision vs an f32 table), cast back to the output dtype on store.
    out_ref[...] = (
        seq_ref[...].astype(jnp.float32) + pos_ref[...].astype(jnp.float32)
    ).astype(out_ref.dtype)


def _splitmix32(x):
    # Stateless 32-bit mixer (splitmix32 finalizer); logical shifts on uint32.
    x = x ^ (x >> 16)
    x = x * jnp.uint32(0x7FEB352D)
    x = x ^ (x >> 15)
    x = x * jnp.uint32(0x846CA68B)
    x = x ^ (x >> 16)
    return x


def _pos_embed_train_kernel(seq_ref, pos_ref, out_ref, *, dropout_prob, seed):
    shape = seq_ref.shape
    # Unique flat element index within this block.  The block spans the full
    # trailing extent, so consecutive grid steps cover contiguous flat ranges
    # and `pid * block_elems + local_flat` is globally unique -> decorrelated
    # dropout masks across tiles.
    flat = jnp.zeros(shape, dtype=jnp.uint32)
    stride = 1
    for ax in range(len(shape) - 1, -1, -1):
        idx = jax.lax.broadcasted_iota(jnp.int32, shape, ax).astype(jnp.uint32)
        flat = flat + idx * jnp.uint32(stride)
        stride *= shape[ax]
    base = pl.program_id(0).astype(jnp.uint32) * jnp.uint32(stride)
    bits = _splitmix32(flat + base + jnp.uint32(seed) * jnp.uint32(0x9E3779B9))

    # Inverted dropout via integer threshold on the low 24 bits:
    # keep with prob (1 - p), scale kept values by 1 / (1 - p).
    thresh = jnp.uint32(int(round(dropout_prob * float(1 << 24))))
    keep = (bits & jnp.uint32(0x00FFFFFF)) >= thresh
    scale = jnp.float32(1.0 / (1.0 - dropout_prob))

    x = seq_ref[...].astype(jnp.float32) + pos_ref[...].astype(jnp.float32)
    out_ref[...] = (x * jnp.where(keep, scale, jnp.float32(0.0))).astype(out_ref.dtype)


# ----------------------------- wrapper ------------------------------------ #
def learned_pos_embedding(seq, weight, *, dropout_prob=0.0, training=False, seed=0):
    """seq: (B, S, D); weight: (max_seq_len, D). Returns (B, S, D)."""
    B, S, D = seq.shape
    max_seq_len, Dw = weight.shape
    if Dw != D:
        raise ValueError(f"pos_embed_dim mismatch: {Dw} != {D}")
    if S > max_seq_len:
        raise ValueError(
            "Sequence is longer than number of available positional embeddings: "
            f"{S} > {max_seq_len}"
        )

    itemsize = jnp.dtype(seq.dtype).itemsize
    SD = S * D

    if SD % 128 == 0:
        # Lane-dense path: flatten trailing (S, D) -> S*D (multiple of 128 lanes).
        # Both reshapes are contiguous row-major -> no data movement.
        seq_in = seq.reshape(B, SD)
        pos_in = weight.reshape(1, max_seq_len * D)  # BlockSpec windows first S*D cols
        rows_fit = max(1, _TARGET_BLOCK_BYTES // (SD * itemsize))
        if rows_fit >= B or rows_fit < 8:
            block_b = B
        else:
            block_b = (rows_fit // 8) * 8  # second-to-last block dim: multiple of 8
        seq_spec = pl.BlockSpec((block_b, SD), lambda i: (i, 0))
        pos_spec = pl.BlockSpec((1, SD), lambda i: (0, 0))
        out_spec = pl.BlockSpec((block_b, SD), lambda i: (i, 0))
        out_shape = jax.ShapeDtypeStruct((B, SD), seq.dtype)
    else:
        # Fallback: keep trailing (S, D) whole (block == full trailing dims).
        seq_in = seq
        pos_in = weight[:S, :]
        block_b = max(1, min(B, _TARGET_BLOCK_BYTES // (SD * itemsize)))
        seq_spec = pl.BlockSpec((block_b, S, D), lambda i: (i, 0, 0))
        pos_spec = pl.BlockSpec((S, D), lambda i: (0, 0))
        out_spec = pl.BlockSpec((block_b, S, D), lambda i: (i, 0, 0))
        out_shape = jax.ShapeDtypeStruct((B, S, D), seq.dtype)

    grid_b = pl.cdiv(B, block_b)

    if training and dropout_prob > 0.0:
        kernel = functools.partial(
            _pos_embed_train_kernel,
            dropout_prob=float(dropout_prob),
            seed=int(seed),
        )
    else:
        kernel = _pos_embed_eval_kernel

    out = pl.pallas_call(
        kernel,
        out_shape=out_shape,
        grid=(grid_b,),
        in_specs=[seq_spec, pos_spec],
        out_specs=out_spec,
        compiler_params=pltpu.CompilerParams(dimension_semantics=("parallel",)),
    )(seq_in, pos_in)
    return out.reshape(B, S, D)


# ------------------------------- main -------------------------------------- #
if __name__ == "__main__":
    max_seq_len = 16
    pos_embed_dim = 32
    dropout_prob = 0.1

    B, S, D = 2, 8, pos_embed_dim  # S*D = 256 -> lane-dense flattened path

    key = jax.random.PRNGKey(0)
    k_seq, k_emb = jax.random.split(key)
    seq = jax.random.normal(k_seq, (B, S, D), dtype=jnp.float32)
    # nn.Embedding default init: weight ~ N(0, 1)
    embedding_weight = jax.random.normal(k_emb, (max_seq_len, pos_embed_dim), dtype=jnp.float32)

    ref = seq + embedding_weight[:S, :][None, :, :]

    # Eval-mode forward (dropout = identity): exact match vs reference.
    out_eval = jax.block_until_ready(
        learned_pos_embedding(seq, embedding_weight, dropout_prob=dropout_prob, training=False)
    )
    assert out_eval.shape == (B, S, D)
    assert jnp.allclose(out_eval, ref, atol=1e-6), "eval-mode mismatch vs reference"

    # Training-mode forward (in-kernel dropout mask + 1/(1-p) scaling).
    out_train = jax.block_until_ready(
        learned_pos_embedding(seq, embedding_weight, dropout_prob=dropout_prob, training=True, seed=0)
    )
    assert out_train.shape == (B, S, D)
    scale = 1.0 / (1.0 - dropout_prob)
    is_kept = jnp.isclose(out_train, ref * scale, atol=1e-5)
    is_dropped = out_train == 0.0
    assert bool(jnp.all(is_kept | is_dropped)), "train-mode values are neither kept nor dropped"
    frac_dropped = float(jnp.mean((is_dropped & ~is_kept).astype(jnp.float32)))
    assert 0.0 < frac_dropped < 0.35, f"implausible dropout rate {frac_dropped}"

    print("KERNEL_OK")
</pallas_src>

<mosaic_0001>
module attributes {stable_mosaic.version = 11 : i64} {
  func.func @_pos_embed_eval_kernel(%arg0: i32, %arg1: memref<2x256xf32, #tpu.memory_space<vmem>>, %arg2: memref<1x256xf32, #tpu.memory_space<vmem>>, %arg3: memref<2x256xf32, #tpu.memory_space<vmem>>) attributes {dimension_semantics = [#tpu.dimension_semantics<parallel>], iteration_bounds = array<i64: 1>, scalar_prefetch = 0 : i64, scratch_operands = 0 : i64, tpu.core_type = #tpu.core_type<tc>, window_params = [{transform_indices = @transform_0, window_bounds = array<i64: 2, 256>}, {transform_indices = @transform_1, window_bounds = array<i64: 1, 256>}, {transform_indices = @transform_2, window_bounds = array<i64: 2, 256>}]} {
    %c0 = arith.constant 0 : index
    %c0_0 = arith.constant 0 : index
    %0 = vector.load %arg1[%c0, %c0_0] : memref<2x256xf32, #tpu.memory_space<vmem>>, vector<2x256xf32>
    %c0_1 = arith.constant 0 : index
    %c0_2 = arith.constant 0 : index
    %1 = vector.load %arg2[%c0_1, %c0_2] : memref<1x256xf32, #tpu.memory_space<vmem>>, vector<1x256xf32>
    %2 = vector.broadcast %1 : vector<1x256xf32> to vector<2x256xf32>
    %3 = arith.addf %0, %2 : vector<2x256xf32>
    %c0_3 = arith.constant 0 : index
    %c0_4 = arith.constant 0 : index
    %4 = vector.load %arg3[%c0_3, %c0_4] : memref<2x256xf32, #tpu.memory_space<vmem>>, vector<2x256xf32>
    tpu.vector_store %arg3[%c0_3, %c0_4], %3 {strides = array<i32>} : memref<2x256xf32, #tpu.memory_space<vmem>>, vector<2x256xf32>,
    return
  }
  func.func @transform_0(%arg0: i32) -> (i32, i32) {
    %c0_i32 = arith.constant 0 : i32
    %c0_i32_0 = arith.constant 0 : i32
    return %arg0, %c0_i32 : i32, i32
  }
  func.func @transform_1(%arg0: i32) -> (i32, i32) {
    %c0_i32 = arith.constant 0 : i32
    %c0_i32_0 = arith.constant 0 : i32
    %c0_i32_1 = arith.constant 0 : i32
    return %c0_i32, %c0_i32_0 : i32, i32
  }
  func.func @transform_2(%arg0: i32) -> (i32, i32) {
    %c0_i32 = arith.constant 0 : i32
    %c0_i32_0 = arith.constant 0 : i32
    return %arg0, %c0_i32 : i32, i32
  }
}

</mosaic_0001>

<llo_original>
// kernel: tpu_custom_call.1
$region0: #{tpu_custom_call.1}
  #allocation0 [shape = 'u32[]', space=smem, size = 0x4, offset = 0x4, fixed_abs, tag = 'smem constant byte address 0x4 - core index']
  #allocation1 [shape = 'u32[144,128]{1,0:T(1,128)}', space=vmem, size = 0x12000, scoped, tag = 'internal scratch']
  %s0 = inlined_call_operand.hbm [shape: f32[2,256], index: 0, kind: input, shape index: {}]
  %s1 = inlined_call_operand.hbm [shape: f32[1,512], index: 1, kind: input, shape index: {}]
  %s2 = inlined_call_operand.hbm [shape: f32[2,256], index: 2, kind: output, shape index: {}]
  %s3 = sld [smem:[#allocation0]]
  $region26: #{tpu_custom_call.1} parent=0
    _
  %s5 = ssub.s32 1, %s3
  %s6 = scalar_select 0, %s5, %s3
  $region1: #{tpu_custom_call.1} parent=0
    #allocation2 [shape = 'u8[2048]{0}', space=vmem, size = 0x800, scoped, tag = 'input window, operand 0, single buffered']
    #allocation3 [shape = 's32[1]{0}', space=sflag, size = 0x4, scoped, tag = 'scoped memory for tpu_custom_call.1']
    #allocation4 [shape = 's32[1]{0}', space=sflag, size = 0x4, scoped, tag = 'scoped memory for tpu_custom_call.1']
    #allocation5 [shape = 'u8[1024]{0}', space=vmem, size = 0x400, scoped, tag = 'input window, operand 1, single buffered']
    #allocation6 [shape = 's32[1]{0}', space=sflag, size = 0x4, scoped, tag = 'scoped memory for tpu_custom_call.1']
    #allocation7 [shape = 'u8[2048]{0}', space=vmem, size = 0x800, scoped, tag = 'output window, operand 0, single buffered']
    %7 = vsyncpa [#allocation3], 0
    %8 = vsyncpa [#allocation6], 0
    %9 = vsyncpa [#allocation4], 0
    // Predicated region
    $region2: #{tpu_custom_call.1} parent=1 // pred_check
      _
    $region3: #{tpu_custom_call.1} parent=1 // pred_check_branch
      %11 = sbr.rel (0) target = $region5
    $region4: #{tpu_custom_call.1} parent=1 // pred_region
      %s13 = ssub.s32 64, 64
      %14 = vsyncadd [#allocation3], %s13
      %s16 = sshll.u32 [#allocation2], 4
      %s17 = int_to_ptr.vmem [resolvable:$true] %s16
      %19 = dma.hbm_to_vmem [thread:$0]  %s0, 64, %s17, [#allocation3]
    $region5: #{tpu_custom_call.1} parent=1 // pred_fallthru
      _
    // Predicated region
    $region6: #{tpu_custom_call.1} parent=1 // pred_check
      _
    $region7: #{tpu_custom_call.1} parent=1 // pred_check_branch
      %21 = sbr.rel (0) target = $region9
    $region8: #{tpu_custom_call.1} parent=1 // pred_region
      %s23 = ssub.s32 32, 32
      %24 = vsyncadd [#allocation6], %s23
      %s26 = sshll.u32 [#allocation5], 4
      %s27 = int_to_ptr.vmem [resolvable:$true] %s26
      %29 = dma.hbm_to_vmem [thread:$0]  %s1, 32, %s27, [#allocation6]
    $region9: #{tpu_custom_call.1} parent=1 // pred_fallthru
      _
    // Predicated region
    $region10: #{tpu_custom_call.1} parent=1 // pred_check
      _
    $region11: #{tpu_custom_call.1} parent=1 // pred_check_branch
      %31 = sbr.rel (0) target = $region13
    $region12: #{tpu_custom_call.1} parent=1 // pred_region
      %32 = dma.done [#allocation3], 64
    $region13: #{tpu_custom_call.1} parent=1 // pred_fallthru
      _
    // Predicated region
    $region14: #{tpu_custom_call.1} parent=1 // pred_check
      _
    $region15: #{tpu_custom_call.1} parent=1 // pred_check_branch
      %34 = sbr.rel (0) target = $region17
    $region16: #{tpu_custom_call.1} parent=1 // pred_region
      %35 = dma.done [#allocation6], 32
    $region17: #{tpu_custom_call.1} parent=1 // pred_fallthru
      _
    %v36 = vld [vmem:[#allocation2] sm:$0xf]
    %v37 = vld [vmem:[#allocation5] sm:$0x3]
    %v39 = vlaneseq
    %v40 = vshrl.u32 %v39, 7
    %v41 = vsub.s32 0, %v40
    %v42 = vrot.slane %v37, %v41
    %v43 = vlaneseq
    %v44 = vshrl.u32 %v43, 7
    %v45 = vsub.s32 1, %v44
    %v46 = vrot.slane %v37, %v45
    %v47 = vcombine.low %v42, %v46
    %v49 = vunpack.c.l.s4 1983009808
    %v50 = vunpack.c.0.s8 %v49
    %v51 = vlaneseq
    %v52 = vshrl.u32 %v51, 7
    %v53 = vsub.s32 %v50, %v52
    %v54 = vrot.slane %v47, %v53
    %v56 = vadd.f32 %v36, %v54
    %57 = vst [vmem:[#allocation7] sm:$0xf] %v56
    // Predicated region
    $region18: #{tpu_custom_call.1} parent=1 // pred_check
      _
    $region19: #{tpu_custom_call.1} parent=1 // pred_check_branch
      %59 = sbr.rel (0) target = $region21
    $region20: #{tpu_custom_call.1} parent=1 // pred_region
      %s61 = ssub.s32 64, 64
      %62 = vsyncadd [#allocation4], %s61
      %s64 = sshll.u32 [#allocation7], 4
      %s65 = int_to_ptr.vmem [resolvable:$true] %s64
      %67 = dma.vmem_to_hbm [thread:$0]  %s65, 64, %s2, [#allocation4]
    $region21: #{tpu_custom_call.1} parent=1 // pred_fallthru
      _
    // Predicated region
    $region22: #{tpu_custom_call.1} parent=1 // pred_check
      _
    $region23: #{tpu_custom_call.1} parent=1 // pred_check_branch
      %69 = sbr.rel (0) target = $region25
    $region24: #{tpu_custom_call.1} parent=1 // pred_region
      %70 = dma.done [#allocation4], 64
    $region25: #{tpu_custom_call.1} parent=1 // pred_fallthru
      _
    %71 = vsyncpa [#allocation3], 1
    %72 = vsyncpa [#allocation6], 1
    %73 = vsyncpa [#allocation4], 1

</llo_original>
